<compile_context>
chip_gen: v7x
topology: tpu7x:2x2x1
jax: 0.10.0
libtpu: 0.0.40
codegen_flags: <defaults>
</compile_context>

<pallas_src>
import math

import jax
import jax.numpy as jnp
from jax.experimental import pallas as pl
from jax.experimental.pallas import tpu as pltpu

# Constants from the module signature (synthetic, deterministic)
WINDOW_SIZE = 16
BYTES_PER_ENTRY = 4
MAX_LEN = WINDOW_SIZE * BYTES_PER_ENTRY  # 64

_LANE = 128
_SUBLANE = 8


def make_pe(d_model: int, max_len: int = MAX_LEN) -> jnp.ndarray:
    """Deterministic sinusoidal positional-encoding buffer, shape (max_len, d_model).

    Matches the PyTorch buffer (squeezed middle dim) for even d_model.
    """
    assert d_model % 2 == 0, "PositionalEncoding requires an even d_model"
    position = jnp.arange(max_len, dtype=jnp.float32)[:, None]          # (max_len, 1)
    div_term = jnp.exp(
        jnp.arange(0, d_model, 2, dtype=jnp.float32) * (-math.log(10000.0) / d_model)
    )                                                                    # (d/2,)
    angles = position * div_term                                         # (max_len, d/2)
    pe = jnp.zeros((max_len, d_model), dtype=jnp.float32)
    pe = pe.at[:, 0::2].set(jnp.sin(angles))
    pe = pe.at[:, 1::2].set(jnp.cos(angles))
    return pe


def _pos_enc_kernel(x_ref, pe_ref, o_ref):
    # x_ref/o_ref: (TB, LT) lane-dense slab of the current (row, lane) tile.
    # pe_ref: (NJ, LT) full positional-encoding table, resident in VMEM (float32).
    j = pl.program_id(1)
    pe_row = pe_ref[pl.ds(j, 1), :]                                # (1, LT), f32
    # Add in f32 (pe stays f32) and round once to the output dtype — pure VPU add.
    o_ref[...] = (x_ref[...].astype(jnp.float32) + pe_row).astype(o_ref.dtype)


def _choose_tiles(B: int, SD_pad: int, itemsize: int, target_bytes: int):
    """Pick (row_tile, lane_tile) so each block is <= target_bytes.

    lane_tile: multiple-of-128 divisor of SD_pad.
    row_tile:  multiple-of-8 divisor of B, or the full B (always a legal block dim).
    """
    lane_divs = sorted(
        (d for d in range(_LANE, SD_pad + 1, _LANE) if SD_pad % d == 0), reverse=True
    )  # non-empty: SD_pad itself is a multiple of 128
    lane_tile = next((d for d in lane_divs if d * itemsize <= target_bytes), lane_divs[-1])

    row_divs = sorted(
        (d for d in range(_SUBLANE, B + 1, _SUBLANE) if B % d == 0), reverse=True
    )
    if B * lane_tile * itemsize <= target_bytes:
        TB = B
    else:
        TB = next((d for d in row_divs if d * lane_tile * itemsize <= target_bytes), None)
        if TB is None:
            # No usable row split (e.g. B has no multiple-of-8 divisor):
            # keep the full batch as the row tile and shrink the lane tile instead.
            TB = B
            lane_tile = next(
                (d for d in lane_divs if B * d * itemsize <= target_bytes), lane_divs[-1]
            )

    # Megacore: guarantee >=2 grid steps for non-trivial tensors so v7x's two
    # TensorCores both get work (harmless on single-TC v5e/v6e).
    if (B // TB) * (SD_pad // lane_tile) == 1 and B * SD_pad * itemsize > (1 << 20):
        smaller_rows = [d for d in row_divs if d < B]
        smaller_lanes = [d for d in lane_divs if d < lane_tile]
        if smaller_rows:
            TB = smaller_rows[0]
        elif smaller_lanes:
            lane_tile = smaller_lanes[0]

    return TB, lane_tile


def positional_encoding(
    x: jnp.ndarray,
    pe: jnp.ndarray,
    *,
    force_pallas: bool = False,
    donate: bool = False,
    target_block_bytes: int = 4 << 20,
) -> jnp.ndarray:
    """x: (batch, seq, d_model); pe: (max_len, d_model). Returns x + pe[:seq]."""
    B, S, D = x.shape
    if S > pe.shape[0]:
        raise ValueError(f"sequence length {S} exceeds max_len {pe.shape[0]}")

    pe_slice = pe[:S, :].astype(jnp.float32)                       # (S, D) fp32
    itemsize = jnp.dtype(x.dtype).itemsize
    total_bytes = B * S * D * itemsize

    # Tiny tensors (the module's real sizes): a fused XLA add beats paying the
    # custom-call + per-step overhead of a separate HBM-bound kernel.
    if not force_pallas and total_bytes <= (256 << 10):
        return (x.astype(jnp.float32) + pe_slice[None, :, :]).astype(x.dtype)

    SD = S * D
    SD_pad = -(-SD // _LANE) * _LANE                               # round up to 128

    # Wrapper-side layout plumbing: lane-dense (B, SD) views; pad ragged lanes so
    # every store is an unmasked full-vreg vst.
    x_flat = x.reshape(B, SD)
    pe_row = pe_slice.reshape(1, SD)
    if SD_pad != SD:
        x_flat = jnp.pad(x_flat, ((0, 0), (0, SD_pad - SD)))
        pe_row = jnp.pad(pe_row, ((0, 0), (0, SD_pad - SD)))

    TB, LT = _choose_tiles(B, SD_pad, itemsize, target_block_bytes)
    NJ = SD_pad // LT
    pe_tiles = pe_row.reshape(NJ, LT)                              # (NJ, LT) fp32, whole array -> VMEM

    grid = (B // TB, NJ)
    block_bytes = TB * LT * itemsize
    pe_bytes = NJ * LT * 4
    # 2x double-buffered input blocks + 2x output blocks + resident pe + slack;
    # cap below v7x's 64 MiB physical VMEM.
    vmem_limit = int(min(48 << 20, max(32 << 20, 4 * block_bytes + pe_bytes + (4 << 20))))

    out_flat = pl.pallas_call(
        _pos_enc_kernel,
        out_shape=jax.ShapeDtypeStruct((B, SD_pad), x.dtype),
        grid_spec=pltpu.PrefetchScalarGridSpec(
            num_scalar_prefetch=0,
            grid=grid,
            in_specs=[
                pl.BlockSpec((TB, LT), lambda i, j: (i, j)),
                # Whole pe table resident in VMEM for the entire kernel — no
                # per-step DMA / double buffers for a never-changing operand.
                pl.BlockSpec(memory_space=pltpu.MemorySpace.VMEM),
            ],
            out_specs=pl.BlockSpec((TB, LT), lambda i, j: (i, j)),
        ),
        compiler_params=pltpu.CompilerParams(
            dimension_semantics=("parallel", "parallel"),
            vmem_limit_bytes=vmem_limit,
        ),
        cost_estimate=pl.CostEstimate(
            flops=B * SD_pad,
            transcendentals=0,
            bytes_accessed=2 * B * SD_pad * itemsize + pe_bytes,
        ),
        input_output_aliases=({0: 0} if donate else {}),
    )(x_flat, pe_tiles)

    if SD_pad != SD:
        out_flat = out_flat[:, :SD]
    return out_flat.reshape(B, S, D)


if __name__ == "__main__":
    batch, seq, d_model = 2, 8, 32
    key = jax.random.PRNGKey(0)
    x = jax.random.normal(key, (batch, seq, d_model), dtype=jnp.float32)

    pe = make_pe(d_model, MAX_LEN)
    # force_pallas=True so the Pallas kernel (not the tiny-tensor XLA path) runs.
    out = positional_encoding(x, pe, force_pallas=True)
    out = jax.block_until_ready(out)

    # Reference check (pure JAX, mirrors the PyTorch forward exactly)
    x_perm = jnp.transpose(x, (1, 0, 2))                 # (seq, batch, d)
    ref = x_perm + pe[:seq][:, None, :]                  # pe[:seq] -> (seq, 1, d)
    ref = jnp.transpose(ref, (1, 0, 2))                  # back to (batch, seq, d)
    assert out.shape == x.shape
    assert jnp.allclose(out, ref, atol=1e-6), "mismatch vs reference"

    print("KERNEL_OK")
</pallas_src>

<mosaic_0001>
module attributes {stable_mosaic.version = 11 : i64} {
  func.func @_pos_enc_kernel(%arg0: i32, %arg1: i32, %arg2: memref<2x256xf32, #tpu.memory_space<vmem>>, %arg3: memref<1x256xf32, #tpu.memory_space<vmem>>, %arg4: memref<2x256xf32, #tpu.memory_space<vmem>>) attributes {dimension_semantics = [#tpu.dimension_semantics<parallel>, #tpu.dimension_semantics<parallel>], iteration_bounds = array<i64: 1, 1>, scalar_prefetch = 0 : i64, scratch_operands = 0 : i64, tpu.core_type = #tpu.core_type<tc>, window_params = [{transform_indices = @transform_0, window_bounds = array<i64: 2, 256>}, {pipeline_mode = #tpu.pipeline_mode<synchronous>, transform_indices = @transform_1, window_bounds = array<i64: 1, 256>}, {transform_indices = @transform_2, window_bounds = array<i64: 2, 256>}]} {
    %0 = arith.index_cast %arg1 : i32 to index
    %c0 = arith.constant 0 : index
    %1 = vector.load %arg3[%0, %c0] : memref<1x256xf32, #tpu.memory_space<vmem>>, vector<1x256xf32>
    %c0_0 = arith.constant 0 : index
    %c0_1 = arith.constant 0 : index
    %2 = vector.load %arg2[%c0_0, %c0_1] : memref<2x256xf32, #tpu.memory_space<vmem>>, vector<2x256xf32>
    %3 = vector.broadcast %1 : vector<1x256xf32> to vector<2x256xf32>
    %4 = arith.addf %2, %3 : vector<2x256xf32>
    %c0_2 = arith.constant 0 : index
    %c0_3 = arith.constant 0 : index
    %5 = vector.load %arg4[%c0_2, %c0_3] : memref<2x256xf32, #tpu.memory_space<vmem>>, vector<2x256xf32>
    tpu.vector_store %arg4[%c0_2, %c0_3], %4 {strides = array<i32>} : memref<2x256xf32, #tpu.memory_space<vmem>>, vector<2x256xf32>,
    return
  }
  func.func @transform_0(%arg0: i32, %arg1: i32) -> (i32, i32) {
    %c0_i32 = arith.constant 0 : i32
    return %arg0, %arg1 : i32, i32
  }
  func.func @transform_1(%arg0: i32, %arg1: i32) -> (i32, i32) {
    %c0_i32 = arith.constant 0 : i32
    %c0_i32_0 = arith.constant 0 : i32
    %c0_i32_1 = arith.constant 0 : i32
    return %c0_i32, %c0_i32_0 : i32, i32
  }
  func.func @transform_2(%arg0: i32, %arg1: i32) -> (i32, i32) {
    %c0_i32 = arith.constant 0 : i32
    return %arg0, %arg1 : i32, i32
  }
}

</mosaic_0001>

<llo_original>
// kernel: tpu_custom_call.1
$region0: #{tpu_custom_call.1}
  #allocation0 [shape = 'u32[]', space=smem, size = 0x4, offset = 0x4, fixed_abs, tag = 'smem constant byte address 0x4 - core index']
  #allocation1 [shape = 'u32[144,128]{1,0:T(1,128)}', space=vmem, size = 0x12000, scoped, tag = 'internal scratch']
  %s0 = inlined_call_operand.hbm [shape: f32[2,256], index: 0, kind: input, shape index: {}]
  %s1 = inlined_call_operand.vmem [shape: f32[1,256], index: 1, kind: input, shape index: {}]
  %s2 = inlined_call_operand.hbm [shape: f32[2,256], index: 2, kind: output, shape index: {}]
  %s3 = sld [smem:[#allocation0]]
  $region22: #{tpu_custom_call.1} parent=0
    _
  %s5 = ssub.s32 1, %s3
  %s6 = scalar_select 0, %s5, %s3
  $region1: #{tpu_custom_call.1} parent=0
    #allocation2 [shape = 'u8[2048]{0}', space=vmem, size = 0x800, scoped, tag = 'input window, operand 0, single buffered']
    #allocation3 [shape = 's32[1]{0}', space=sflag, size = 0x4, scoped, tag = 'scoped memory for tpu_custom_call.1']
    #allocation4 [shape = 's32[1]{0}', space=sflag, size = 0x4, scoped, tag = 'scoped memory for tpu_custom_call.1']
    #allocation5 [shape = 'u8[2048]{0}', space=vmem, size = 0x800, scoped, tag = 'output window, operand 0, single buffered']
    %7 = vsyncpa [#allocation3], 0
    %8 = vsyncpa [#allocation4], 0
    // Predicated region
    $region2: #{tpu_custom_call.1} parent=1 // pred_check
      _
    $region3: #{tpu_custom_call.1} parent=1 // pred_check_branch
      %10 = sbr.rel (0) target = $region5
    $region4: #{tpu_custom_call.1} parent=1 // pred_region
      %s12 = ssub.s32 64, 64
      %13 = vsyncadd [#allocation3], %s12
      %s15 = sshll.u32 [#allocation2], 4
      %s16 = int_to_ptr.vmem [resolvable:$true] %s15
      %18 = dma.hbm_to_vmem [thread:$0]  %s0, 64, %s16, [#allocation3]
    $region5: #{tpu_custom_call.1} parent=1 // pred_fallthru
      _
    // Predicated region
    $region6: #{tpu_custom_call.1} parent=1 // pred_check
      _
    $region7: #{tpu_custom_call.1} parent=1 // pred_check_branch
      %20 = sbr.rel (0) target = $region9
    $region8: #{tpu_custom_call.1} parent=1 // pred_region
      _
    $region9: #{tpu_custom_call.1} parent=1 // pred_fallthru
      _
    // Predicated region
    $region10: #{tpu_custom_call.1} parent=1 // pred_check
      _
    $region11: #{tpu_custom_call.1} parent=1 // pred_check_branch
      %22 = sbr.rel (0) target = $region13
    $region12: #{tpu_custom_call.1} parent=1 // pred_region
      %23 = dma.done [#allocation3], 64
    $region13: #{tpu_custom_call.1} parent=1 // pred_fallthru
      _
    %s24 = smul.u32 0, 2
    %s25 = scalar_lea.vmem %s1, %s24
    %v26 = vld [vmem:[%s25] sm:$0x3]
    %v27 = vld [vmem:[#allocation2] sm:$0xf]
    %v29 = vlaneseq
    %v30 = vshrl.u32 %v29, 7
    %v31 = vsub.s32 0, %v30
    %v32 = vrot.slane %v26, %v31
    %v33 = vlaneseq
    %v34 = vshrl.u32 %v33, 7
    %v35 = vsub.s32 1, %v34
    %v36 = vrot.slane %v26, %v35
    %v37 = vcombine.low %v32, %v36
    %v39 = vunpack.c.l.s4 1983009808
    %v40 = vunpack.c.0.s8 %v39
    %v41 = vlaneseq
    %v42 = vshrl.u32 %v41, 7
    %v43 = vsub.s32 %v40, %v42
    %v44 = vrot.slane %v37, %v43
    %v46 = vadd.f32 %v27, %v44
    %47 = vst [vmem:[#allocation5] sm:$0xf] %v46
    // Predicated region
    $region14: #{tpu_custom_call.1} parent=1 // pred_check
      _
    $region15: #{tpu_custom_call.1} parent=1 // pred_check_branch
      %49 = sbr.rel (0) target = $region17
    $region16: #{tpu_custom_call.1} parent=1 // pred_region
      %s51 = ssub.s32 64, 64
      %52 = vsyncadd [#allocation4], %s51
      %s54 = sshll.u32 [#allocation5], 4
      %s55 = int_to_ptr.vmem [resolvable:$true] %s54
      %57 = dma.vmem_to_hbm [thread:$0]  %s55, 64, %s2, [#allocation4]
    $region17: #{tpu_custom_call.1} parent=1 // pred_fallthru
      _
    // Predicated region
    $region18: #{tpu_custom_call.1} parent=1 // pred_check
      _
    $region19: #{tpu_custom_call.1} parent=1 // pred_check_branch
      %59 = sbr.rel (0) target = $region21
    $region20: #{tpu_custom_call.1} parent=1 // pred_region
      %60 = dma.done [#allocation4], 64
    $region21: #{tpu_custom_call.1} parent=1 // pred_fallthru
      _
    %61 = vsyncpa [#allocation3], 1
    %62 = vsyncpa [#allocation4], 1

</llo_original>
